<compile_context>
chip_gen: v5e
topology: v5e:2x2
jax: 0.10.0
libtpu: 0.0.40
codegen_flags: <defaults>
</compile_context>

<pallas_src>
import functools

import jax
import jax.numpy as jnp
import numpy as np
from jax import lax
from jax.experimental import pallas as pl
from jax.experimental.pallas import tpu as pltpu


def _round_up(x, m):
    return (x + m - 1) // m * m


def _pick_batch_block(n, cin_p, p_p, s_pad, budget_bytes=8 * 1024 * 1024):
    """Fold the whole batch into a single grid step if it fits VMEM.

    One fat step amortizes the ~0.35us/step pipeline overhead on single-TC
    chips (v5e/v6e); larger batches keep a per-image "parallel" grid axis so
    multi-TC chips (v7x) can shard it.
    """
    per_img = 4 * s_pad * (2 * (cin_p + p_p)        # double-buffered in/out
                           + 9 * cin_p + 9 * p_p    # stacked-tap temporaries
                           + 2 * p_p)               # y1 / y2
    return n if n * per_img <= budget_bytes else 1


def _fused_block_kernel(x_ref, mask_ref, w1_ref, b1_ref, w2_ref, b2_ref,
                        *rest, bn, offs1, offs2, S_len, has_proj):
    """Fused ResNet basic block, channels on sublanes / flat spatial on lanes.

    x_ref   : (bn, Cin_p, S)   zero-margined padded input, row = h*Wp + w
    mask_ref: (1, S)           1.0 at interior (original-image) positions
    w1_ref  : (P_p, 9*Cin_p)   conv1 taps stacked on K, BN1 scale folded in
    b1_ref  : (P_p, 1)         BN1 shift
    w2_ref  : (P_p, 9*P_p)     conv2 taps stacked on K, BN2 scale folded in
    b2_ref  : (P_p, 1)         BN2 shift
    wid_ref : (P_p, Cin_p)     1x1 projection weight (only when has_proj)
    o_ref   : (bn, P_p, S)     block output on the flat pad-1 grid
    """
    if has_proj:
        wid_ref, o_ref = rest
    else:
        (o_ref,) = rest

    mask = mask_ref[...]                       # (1, S), lane-dense
    w1 = w1_ref[...]
    w2 = w2_ref[...]
    b1 = b1_ref[...]
    b2 = b2_ref[...]
    wid = wid_ref[...] if has_proj else None

    for b in range(bn):                        # static, tiny batch-per-step
        x = x_ref[b]                           # (Cin_p, S)

        # conv3x3(+BN1 scale folded)+shift+ReLU, taps via lane rolls stacked
        # on the contraction axis -> one MXU matmul.
        xt = jnp.concatenate(
            [x if o == 0 else pltpu.roll(x, (-o) % S_len, axis=1)
             for o in offs1], axis=0)          # (9*Cin_p, S)
        y1 = jnp.dot(w1, xt, preferred_element_type=jnp.float32) + b1
        y1 = jnp.maximum(y1, 0.0) * mask       # zero pad ring + lane tail

        # conv3x3(+BN2 scale folded)+shift, stride-dilated taps on y1.
        yt = jnp.concatenate(
            [y1 if o == 0 else pltpu.roll(y1, (-o) % S_len, axis=1)
             for o in offs2], axis=0)          # (9*P_p, S)
        y2 = jnp.dot(w2, yt, preferred_element_type=jnp.float32) + b2

        # Identity branch (fused 1x1 projection or plain identity) + ReLU.
        if has_proj:
            res = jnp.dot(wid, x, preferred_element_type=jnp.float32)
        else:
            res = x
        o_ref[b] = jnp.maximum(y2 + res, 0.0).astype(o_ref.dtype)


def basic_block_forward(x_nchw, params, *, stride, out_channels):
    """conv3x3(s)+BN+ReLU -> conv3x3(1)+BN, + identity/1x1(s), final ReLU."""
    assert stride in (1, 2)
    w1m, b1, w2m, b2, wid = params
    N, Cin, H, W = x_nchw.shape
    P_p = w1m.shape[0]
    Cin_p = w1m.shape[1] // 9
    has_proj = wid is not None

    Hp, Wp = H + 2, W + 2
    So = Hp * Wp
    Ho = (H - 1) // stride + 1
    Wo = (W - 1) // stride + 1

    # Lane-tail size so that the stride-dilated conv2 taps that roll past the
    # ends of the flat axis land in zeros (acts as conv2's zero padding).
    neg_reach = (stride - 1) * (Wp + 1)
    max_read = (1 + stride * Ho) * Wp + (1 + stride * Wo)
    pos_over = max(0, max_read - (So - 1))
    S_pad = _round_up(So + max(neg_reach, pos_over), 128)

    # Flat, channel-padded, zero-margined input (N, Cin_p, S_pad): one pad for
    # channels + spatial ring, one pad for the lane tail. No transposes.
    xp = jnp.pad(x_nchw, ((0, 0), (0, Cin_p - Cin), (1, 1), (1, 1)))
    xp = xp.reshape(N, Cin_p, So)
    xflat = jnp.pad(xp, ((0, 0), (0, 0), (0, S_pad - So))).astype(jnp.float32)

    # Lane-dense (1, S_pad) interior mask (host-built constant, ~S_pad*4 B).
    pidx = np.arange(S_pad)
    hh, ww = pidx // Wp, pidx % Wp
    interior = (pidx < So) & (hh >= 1) & (hh <= H) & (ww >= 1) & (ww <= W)
    mask = jnp.asarray(interior.astype(np.float32).reshape(1, S_pad))

    offs1 = tuple((kh - 1) * Wp + (kw - 1)
                  for kh in range(3) for kw in range(3))
    offs2 = tuple(stride * o for o in offs1)

    bn = _pick_batch_block(N, Cin_p, P_p, S_pad)
    nb = N // bn

    kernel = functools.partial(
        _fused_block_kernel, bn=bn, offs1=offs1, offs2=offs2, S_len=S_pad,
        has_proj=has_proj)

    in_specs = [
        pl.BlockSpec((bn, Cin_p, S_pad), lambda i: (i, 0, 0)),
        pl.BlockSpec((1, S_pad), lambda i: (0, 0)),
        pl.BlockSpec((P_p, 9 * Cin_p), lambda i: (0, 0)),
        pl.BlockSpec((P_p, 1), lambda i: (0, 0)),
        pl.BlockSpec((P_p, 9 * P_p), lambda i: (0, 0)),
        pl.BlockSpec((P_p, 1), lambda i: (0, 0)),
    ]
    args = [xflat, mask, w1m, b1, w2m, b2]
    if has_proj:
        in_specs.append(pl.BlockSpec((P_p, Cin_p), lambda i: (0, 0)))
        args.append(wid)

    out_flat = pl.pallas_call(
        kernel,
        grid=(nb,),
        in_specs=in_specs,
        out_specs=pl.BlockSpec((bn, P_p, S_pad), lambda i: (i, 0, 0)),
        out_shape=jax.ShapeDtypeStruct((N, P_p, S_pad), jnp.float32),
        compiler_params=pltpu.CompilerParams(
            dimension_semantics=("parallel",),
            vmem_limit_bytes=32 * 1024 * 1024),
    )(*args)

    # Gather the strided output positions (tiny XLA slice; already NCHW).
    out = out_flat[:, :out_channels, :So].reshape(N, out_channels, Hp, Wp)
    out = out[:, :, 1::stride, 1::stride][:, :, :Ho, :Wo]
    return out


def _fold_bn(bn, eps=1e-5):
    gamma, beta, mean, var = bn
    scale = gamma / jnp.sqrt(var + eps)
    shift = beta - mean * scale
    return scale, shift


class BasicSmallBlockPallas:
    expansion = 1

    def __init__(self, inplanes, planes, stride, key):
        self.inplanes, self.planes, self.stride = inplanes, planes, stride
        keys = jax.random.split(key, 5)

        def conv_w(k, cout, cin, ks):
            fan_in = cin * ks * ks
            return (jax.random.normal(k, (cout, cin, ks, ks), jnp.float32)
                    / np.sqrt(fan_in))

        def bn_params(k):
            kg, kb, km, kv = jax.random.split(k, 4)
            gamma = 1.0 + 0.1 * jax.random.normal(kg, (planes,), jnp.float32)
            beta = 0.1 * jax.random.normal(kb, (planes,), jnp.float32)
            mean = 0.1 * jax.random.normal(km, (planes,), jnp.float32)
            var = 0.5 + 0.5 * jax.nn.softplus(
                jax.random.normal(kv, (planes,), jnp.float32))
            return gamma, beta, mean, var

        self.w1 = conv_w(keys[0], planes, inplanes, 3)
        self.bn1 = bn_params(keys[1])
        self.w2 = conv_w(keys[2], planes, planes, 3)
        self.bn2 = bn_params(keys[3])
        self.use_proj = (stride != 1) or (inplanes != planes * self.expansion)
        self.wid = (conv_w(keys[4], planes * self.expansion, inplanes, 1)
                    if self.use_proj else None)

    def _prepared_params(self):
        Cin, P = self.inplanes, self.planes * self.expansion
        Cin_p, P_p = _round_up(Cin, 8), _round_up(P, 8)
        scale1, shift1 = _fold_bn(self.bn1)
        scale2, shift2 = _fold_bn(self.bn2)

        # (O, I, kh, kw) -> (O, kh, kw, I), BN scale folded, channels padded
        # to multiples of 8, taps stacked on K -> (P_p, 9*Cin_p).
        w1 = jnp.transpose(self.w1, (0, 2, 3, 1)) * scale1[:, None, None, None]
        w1 = jnp.pad(w1, ((0, P_p - P), (0, 0), (0, 0), (0, Cin_p - Cin)))
        w1m = w1.reshape(P_p, 9 * Cin_p).astype(jnp.float32)

        w2 = jnp.transpose(self.w2, (0, 2, 3, 1)) * scale2[:, None, None, None]
        w2 = jnp.pad(w2, ((0, P_p - P), (0, 0), (0, 0), (0, P_p - P)))
        w2m = w2.reshape(P_p, 9 * P_p).astype(jnp.float32)

        b1 = jnp.pad(shift1, (0, P_p - P)).reshape(P_p, 1).astype(jnp.float32)
        b2 = jnp.pad(shift2, (0, P_p - P)).reshape(P_p, 1).astype(jnp.float32)

        wid = None
        if self.use_proj:
            wid = jnp.pad(self.wid[:, :, 0, 0],
                          ((0, P_p - P), (0, Cin_p - Cin))).astype(jnp.float32)
        return w1m, b1, w2m, b2, wid

    def __call__(self, x_nchw):
        return basic_block_forward(
            x_nchw, self._prepared_params(), stride=self.stride,
            out_channels=self.planes * self.expansion)

    # pure-JAX reference (lax.conv) for correctness check
    def reference(self, x_nchw):
        x = jnp.transpose(x_nchw, (0, 2, 3, 1))

        def conv(inp, w, stride, pad):
            return lax.conv_general_dilated(
                inp, jnp.transpose(w, (2, 3, 1, 0)), (stride, stride),
                [(pad, pad), (pad, pad)],
                dimension_numbers=("NHWC", "HWIO", "NHWC"))

        scale1, shift1 = _fold_bn(self.bn1)
        scale2, shift2 = _fold_bn(self.bn2)
        y = conv(x, self.w1, self.stride, 1) * scale1 + shift1
        y = jax.nn.relu(y)
        y = conv(y, self.w2, 1, 1) * scale2 + shift2
        idy = conv(x, self.wid, self.stride, 0) if self.use_proj else x
        out = jax.nn.relu(y + idy)
        return jnp.transpose(out, (0, 3, 1, 2))


if __name__ == "__main__":
    key = jax.random.PRNGKey(0)
    kx, kp, kx2, kp2 = jax.random.split(key, 4)

    # Projection / stride-2 path.
    N, Cin, H, W = 2, 4, 16, 16
    planes, stride = 8, 2
    x = jax.random.normal(kx, (N, Cin, H, W), jnp.float32)
    block = BasicSmallBlockPallas(Cin, planes, stride, kp)

    out = jax.block_until_ready(block(x))
    assert out.shape == (N, planes * block.expansion, H // stride, W // stride)
    ref = block.reference(x)
    np.testing.assert_allclose(np.asarray(out), np.asarray(ref),
                               atol=1e-4, rtol=1e-4)

    # Identity / stride-1 path.
    x2 = jax.random.normal(kx2, (N, planes, H, W), jnp.float32)
    block2 = BasicSmallBlockPallas(planes, planes, 1, kp2)
    out2 = jax.block_until_ready(block2(x2))
    assert out2.shape == (N, planes, H, W)
    np.testing.assert_allclose(np.asarray(out2),
                               np.asarray(block2.reference(x2)),
                               atol=1e-4, rtol=1e-4)

    print("KERNEL_OK")
</pallas_src>

<mosaic_0001>
module attributes {stable_mosaic.version = 11 : i64} {
  func.func @_fused_block_kernel(%arg0: i32, %arg1: memref<2x8x384xf32, #tpu.memory_space<vmem>>, %arg2: memref<1x384xf32, #tpu.memory_space<vmem>>, %arg3: memref<8x72xf32, #tpu.memory_space<vmem>>, %arg4: memref<8x1xf32, #tpu.memory_space<vmem>>, %arg5: memref<8x72xf32, #tpu.memory_space<vmem>>, %arg6: memref<8x1xf32, #tpu.memory_space<vmem>>, %arg7: memref<8x8xf32, #tpu.memory_space<vmem>>, %arg8: memref<2x8x384xf32, #tpu.memory_space<vmem>>) attributes {dimension_semantics = [#tpu.dimension_semantics<parallel>], iteration_bounds = array<i64: 1>, scalar_prefetch = 0 : i64, scratch_operands = 0 : i64, tpu.core_type = #tpu.core_type<tc>, window_params = [{transform_indices = @transform_0, window_bounds = array<i64: 2, 8, 384>}, {pipeline_mode = #tpu.pipeline_mode<synchronous>, transform_indices = @transform_1, window_bounds = array<i64: 1, 384>}, {pipeline_mode = #tpu.pipeline_mode<synchronous>, transform_indices = @transform_2, window_bounds = array<i64: 8, 72>}, {pipeline_mode = #tpu.pipeline_mode<synchronous>, transform_indices = @transform_3, window_bounds = array<i64: 8, 1>}, {pipeline_mode = #tpu.pipeline_mode<synchronous>, transform_indices = @transform_4, window_bounds = array<i64: 8, 72>}, {pipeline_mode = #tpu.pipeline_mode<synchronous>, transform_indices = @transform_5, window_bounds = array<i64: 8, 1>}, {pipeline_mode = #tpu.pipeline_mode<synchronous>, transform_indices = @transform_6, window_bounds = array<i64: 8, 8>}, {transform_indices = @transform_7, window_bounds = array<i64: 2, 8, 384>}]} {
    %c0 = arith.constant 0 : index
    %c0_0 = arith.constant 0 : index
    %0 = vector.load %arg2[%c0, %c0_0] : memref<1x384xf32, #tpu.memory_space<vmem>>, vector<1x384xf32>
    %c0_1 = arith.constant 0 : index
    %c0_2 = arith.constant 0 : index
    %1 = vector.load %arg3[%c0_1, %c0_2] : memref<8x72xf32, #tpu.memory_space<vmem>>, vector<8x72xf32>
    %c0_3 = arith.constant 0 : index
    %c0_4 = arith.constant 0 : index
    %2 = vector.load %arg5[%c0_3, %c0_4] : memref<8x72xf32, #tpu.memory_space<vmem>>, vector<8x72xf32>
    %c0_5 = arith.constant 0 : index
    %c0_6 = arith.constant 0 : index
    %3 = vector.load %arg4[%c0_5, %c0_6] : memref<8x1xf32, #tpu.memory_space<vmem>>, vector<8x1xf32>
    %c0_7 = arith.constant 0 : index
    %c0_8 = arith.constant 0 : index
    %4 = vector.load %arg6[%c0_7, %c0_8] : memref<8x1xf32, #tpu.memory_space<vmem>>, vector<8x1xf32>
    %c0_9 = arith.constant 0 : index
    %c0_10 = arith.constant 0 : index
    %5 = vector.load %arg7[%c0_9, %c0_10] : memref<8x8xf32, #tpu.memory_space<vmem>>, vector<8x8xf32>
    %c0_11 = arith.constant 0 : index
    %c0_12 = arith.constant 0 : index
    %c0_13 = arith.constant 0 : index
    %6 = vector.load %arg1[%c0_11, %c0_12, %c0_13] : memref<2x8x384xf32, #tpu.memory_space<vmem>>, vector<1x8x384xf32>
    %7 = vector.shape_cast %6 : vector<1x8x384xf32> to vector<8x384xf32>
    %c19_i32 = arith.constant 19 : i32
    %8 = tpu.dynamic_rotate %7 by %c19_i32 dim 1 : vector<8x384xf32>, i32 -> vector<8x384xf32>
    %c18_i32 = arith.constant 18 : i32
    %9 = tpu.dynamic_rotate %7 by %c18_i32 dim 1 : vector<8x384xf32>, i32 -> vector<8x384xf32>
    %c17_i32 = arith.constant 17 : i32
    %10 = tpu.dynamic_rotate %7 by %c17_i32 dim 1 : vector<8x384xf32>, i32 -> vector<8x384xf32>
    %c1_i32 = arith.constant 1 : i32
    %11 = tpu.dynamic_rotate %7 by %c1_i32 dim 1 : vector<8x384xf32>, i32 -> vector<8x384xf32>
    %c383_i32 = arith.constant 383 : i32
    %12 = tpu.dynamic_rotate %7 by %c383_i32 dim 1 : vector<8x384xf32>, i32 -> vector<8x384xf32>
    %c367_i32 = arith.constant 367 : i32
    %13 = tpu.dynamic_rotate %7 by %c367_i32 dim 1 : vector<8x384xf32>, i32 -> vector<8x384xf32>
    %c366_i32 = arith.constant 366 : i32
    %14 = tpu.dynamic_rotate %7 by %c366_i32 dim 1 : vector<8x384xf32>, i32 -> vector<8x384xf32>
    %c365_i32 = arith.constant 365 : i32
    %15 = tpu.dynamic_rotate %7 by %c365_i32 dim 1 : vector<8x384xf32>, i32 -> vector<8x384xf32>
    %16 = tpu.concatenate %8, %9, %10, %11, %7, %12, %13, %14, %15 in 0 : vector<8x384xf32>, vector<8x384xf32>, vector<8x384xf32>, vector<8x384xf32>, vector<8x384xf32>, vector<8x384xf32>, vector<8x384xf32>, vector<8x384xf32>, vector<8x384xf32> -> vector<72x384xf32>
    %cst = arith.constant dense<0.000000e+00> : vector<8x384xf32>
    %17 = tpu.matmul %1, %16, %cst {dimension_numbers = #tpu.dot_dimension_numbers<[1], [0], [0], [1], [0, 0, 1, 1], [], []>} : vector<8x72xf32>, vector<72x384xf32>, vector<8x384xf32> -> vector<8x384xf32>
    %18 = vector.broadcast %3 : vector<8x1xf32> to vector<8x384xf32>
    %19 = arith.addf %17, %18 : vector<8x384xf32>
    %cst_14 = arith.constant 0.000000e+00 : f32
    %20 = vector.broadcast %cst_14 : f32 to vector<8x384xf32>
    %21 = arith.maximumf %19, %20 : vector<8x384xf32>
    %22 = vector.broadcast %0 : vector<1x384xf32> to vector<8x384xf32>
    %23 = arith.mulf %21, %22 : vector<8x384xf32>
    %c38_i32 = arith.constant 38 : i32
    %24 = tpu.dynamic_rotate %23 by %c38_i32 dim 1 : vector<8x384xf32>, i32 -> vector<8x384xf32>
    %c36_i32 = arith.constant 36 : i32
    %25 = tpu.dynamic_rotate %23 by %c36_i32 dim 1 : vector<8x384xf32>, i32 -> vector<8x384xf32>
    %c34_i32 = arith.constant 34 : i32
    %26 = tpu.dynamic_rotate %23 by %c34_i32 dim 1 : vector<8x384xf32>, i32 -> vector<8x384xf32>
    %c2_i32 = arith.constant 2 : i32
    %27 = tpu.dynamic_rotate %23 by %c2_i32 dim 1 : vector<8x384xf32>, i32 -> vector<8x384xf32>
    %c382_i32 = arith.constant 382 : i32
    %28 = tpu.dynamic_rotate %23 by %c382_i32 dim 1 : vector<8x384xf32>, i32 -> vector<8x384xf32>
    %c350_i32 = arith.constant 350 : i32
    %29 = tpu.dynamic_rotate %23 by %c350_i32 dim 1 : vector<8x384xf32>, i32 -> vector<8x384xf32>
    %c348_i32 = arith.constant 348 : i32
    %30 = tpu.dynamic_rotate %23 by %c348_i32 dim 1 : vector<8x384xf32>, i32 -> vector<8x384xf32>
    %c346_i32 = arith.constant 346 : i32
    %31 = tpu.dynamic_rotate %23 by %c346_i32 dim 1 : vector<8x384xf32>, i32 -> vector<8x384xf32>
    %32 = tpu.concatenate %24, %25, %26, %27, %23, %28, %29, %30, %31 in 0 : vector<8x384xf32>, vector<8x384xf32>, vector<8x384xf32>, vector<8x384xf32>, vector<8x384xf32>, vector<8x384xf32>, vector<8x384xf32>, vector<8x384xf32>, vector<8x384xf32> -> vector<72x384xf32>
    %cst_15 = arith.constant dense<0.000000e+00> : vector<8x384xf32>
    %33 = tpu.matmul %2, %32, %cst_15 {dimension_numbers = #tpu.dot_dimension_numbers<[1], [0], [0], [1], [0, 0, 1, 1], [], []>} : vector<8x72xf32>, vector<72x384xf32>, vector<8x384xf32> -> vector<8x384xf32>
    %34 = vector.broadcast %4 : vector<8x1xf32> to vector<8x384xf32>
    %35 = arith.addf %33, %34 : vector<8x384xf32>
    %cst_16 = arith.constant dense<0.000000e+00> : vector<8x384xf32>
    %36 = tpu.matmul %5, %7, %cst_16 {dimension_numbers = #tpu.dot_dimension_numbers<[1], [0], [0], [1], [0, 0, 1, 1], [], []>} : vector<8x8xf32>, vector<8x384xf32>, vector<8x384xf32> -> vector<8x384xf32>
    %37 = arith.addf %35, %36 : vector<8x384xf32>
    %cst_17 = arith.constant 0.000000e+00 : f32
    %38 = vector.broadcast %cst_17 : f32 to vector<8x384xf32>
    %39 = arith.maximumf %37, %38 : vector<8x384xf32>
    %c0_18 = arith.constant 0 : index
    %c0_19 = arith.constant 0 : index
    %c0_20 = arith.constant 0 : index
    %40 = vector.load %arg8[%c0_18, %c0_19, %c0_20] : memref<2x8x384xf32, #tpu.memory_space<vmem>>, vector<1x8x384xf32>
    %41 = vector.shape_cast %40 : vector<1x8x384xf32> to vector<8x384xf32>
    %42 = vector.shape_cast %39 : vector<8x384xf32> to vector<1x8x384xf32>
    tpu.vector_store %arg8[%c0_18, %c0_19, %c0_20], %42 {strides = array<i32>} : memref<2x8x384xf32, #tpu.memory_space<vmem>>, vector<1x8x384xf32>,
    %c1 = arith.constant 1 : index
    %c0_21 = arith.constant 0 : index
    %c0_22 = arith.constant 0 : index
    %43 = vector.load %arg1[%c1, %c0_21, %c0_22] : memref<2x8x384xf32, #tpu.memory_space<vmem>>, vector<1x8x384xf32>
    %44 = vector.shape_cast %43 : vector<1x8x384xf32> to vector<8x384xf32>
    %c19_i32_23 = arith.constant 19 : i32
    %45 = tpu.dynamic_rotate %44 by %c19_i32_23 dim 1 : vector<8x384xf32>, i32 -> vector<8x384xf32>
    %c18_i32_24 = arith.constant 18 : i32
    %46 = tpu.dynamic_rotate %44 by %c18_i32_24 dim 1 : vector<8x384xf32>, i32 -> vector<8x384xf32>
    %c17_i32_25 = arith.constant 17 : i32
    %47 = tpu.dynamic_rotate %44 by %c17_i32_25 dim 1 : vector<8x384xf32>, i32 -> vector<8x384xf32>
    %c1_i32_26 = arith.constant 1 : i32
    %48 = tpu.dynamic_rotate %44 by %c1_i32_26 dim 1 : vector<8x384xf32>, i32 -> vector<8x384xf32>
    %c383_i32_27 = arith.constant 383 : i32
    %49 = tpu.dynamic_rotate %44 by %c383_i32_27 dim 1 : vector<8x384xf32>, i32 -> vector<8x384xf32>
    %c367_i32_28 = arith.constant 367 : i32
    %50 = tpu.dynamic_rotate %44 by %c367_i32_28 dim 1 : vector<8x384xf32>, i32 -> vector<8x384xf32>
    %c366_i32_29 = arith.constant 366 : i32
    %51 = tpu.dynamic_rotate %44 by %c366_i32_29 dim 1 : vector<8x384xf32>, i32 -> vector<8x384xf32>
    %c365_i32_30 = arith.constant 365 : i32
    %52 = tpu.dynamic_rotate %44 by %c365_i32_30 dim 1 : vector<8x384xf32>, i32 -> vector<8x384xf32>
    %53 = tpu.concatenate %45, %46, %47, %48, %44, %49, %50, %51, %52 in 0 : vector<8x384xf32>, vector<8x384xf32>, vector<8x384xf32>, vector<8x384xf32>, vector<8x384xf32>, vector<8x384xf32>, vector<8x384xf32>, vector<8x384xf32>, vector<8x384xf32> -> vector<72x384xf32>
    %cst_31 = arith.constant dense<0.000000e+00> : vector<8x384xf32>
    %54 = tpu.matmul %1, %53, %cst_31 {dimension_numbers = #tpu.dot_dimension_numbers<[1], [0], [0], [1], [0, 0, 1, 1], [], []>} : vector<8x72xf32>, vector<72x384xf32>, vector<8x384xf32> -> vector<8x384xf32>
    %55 = vector.broadcast %3 : vector<8x1xf32> to vector<8x384xf32>
    %56 = arith.addf %54, %55 : vector<8x384xf32>
    %cst_32 = arith.constant 0.000000e+00 : f32
    %57 = vector.broadcast %cst_32 : f32 to vector<8x384xf32>
    %58 = arith.maximumf %56, %57 : vector<8x384xf32>
    %59 = vector.broadcast %0 : vector<1x384xf32> to vector<8x384xf32>
    %60 = arith.mulf %58, %59 : vector<8x384xf32>
    %c38_i32_33 = arith.constant 38 : i32
    %61 = tpu.dynamic_rotate %60 by %c38_i32_33 dim 1 : vector<8x384xf32>, i32 -> vector<8x384xf32>
    %c36_i32_34 = arith.constant 36 : i32
    %62 = tpu.dynamic_rotate %60 by %c36_i32_34 dim 1 : vector<8x384xf32>, i32 -> vector<8x384xf32>
    %c34_i32_35 = arith.constant 34 : i32
    %63 = tpu.dynamic_rotate %60 by %c34_i32_35 dim 1 : vector<8x384xf32>, i32 -> vector<8x384xf32>
    %c2_i32_36 = arith.constant 2 : i32
    %64 = tpu.dynamic_rotate %60 by %c2_i32_36 dim 1 : vector<8x384xf32>, i32 -> vector<8x384xf32>
    %c382_i32_37 = arith.constant 382 : i32
    %65 = tpu.dynamic_rotate %60 by %c382_i32_37 dim 1 : vector<8x384xf32>, i32 -> vector<8x384xf32>
    %c350_i32_38 = arith.constant 350 : i32
    %66 = tpu.dynamic_rotate %60 by %c350_i32_38 dim 1 : vector<8x384xf32>, i32 -> vector<8x384xf32>
    %c348_i32_39 = arith.constant 348 : i32
    %67 = tpu.dynamic_rotate %60 by %c348_i32_39 dim 1 : vector<8x384xf32>, i32 -> vector<8x384xf32>
    %c346_i32_40 = arith.constant 346 : i32
    %68 = tpu.dynamic_rotate %60 by %c346_i32_40 dim 1 : vector<8x384xf32>, i32 -> vector<8x384xf32>
    %69 = tpu.concatenate %61, %62, %63, %64, %60, %65, %66, %67, %68 in 0 : vector<8x384xf32>, vector<8x384xf32>, vector<8x384xf32>, vector<8x384xf32>, vector<8x384xf32>, vector<8x384xf32>, vector<8x384xf32>, vector<8x384xf32>, vector<8x384xf32> -> vector<72x384xf32>
    %cst_41 = arith.constant dense<0.000000e+00> : vector<8x384xf32>
    %70 = tpu.matmul %2, %69, %cst_41 {dimension_numbers = #tpu.dot_dimension_numbers<[1], [0], [0], [1], [0, 0, 1, 1], [], []>} : vector<8x72xf32>, vector<72x384xf32>, vector<8x384xf32> -> vector<8x384xf32>
    %71 = vector.broadcast %4 : vector<8x1xf32> to vector<8x384xf32>
    %72 = arith.addf %70, %71 : vector<8x384xf32>
    %cst_42 = arith.constant dense<0.000000e+00> : vector<8x384xf32>
    %73 = tpu.matmul %5, %44, %cst_42 {dimension_numbers = #tpu.dot_dimension_numbers<[1], [0], [0], [1], [0, 0, 1, 1], [], []>} : vector<8x8xf32>, vector<8x384xf32>, vector<8x384xf32> -> vector<8x384xf32>
    %74 = arith.addf %72, %73 : vector<8x384xf32>
    %cst_43 = arith.constant 0.000000e+00 : f32
    %75 = vector.broadcast %cst_43 : f32 to vector<8x384xf32>
    %76 = arith.maximumf %74, %75 : vector<8x384xf32>
    %c1_44 = arith.constant 1 : index
    %c0_45 = arith.constant 0 : index
    %c0_46 = arith.constant 0 : index
    %77 = vector.load %arg8[%c1_44, %c0_45, %c0_46] : memref<2x8x384xf32, #tpu.memory_space<vmem>>, vector<1x8x384xf32>
    %78 = vector.shape_cast %77 : vector<1x8x384xf32> to vector<8x384xf32>
    %79 = vector.shape_cast %76 : vector<8x384xf32> to vector<1x8x384xf32>
    tpu.vector_store %arg8[%c1_44, %c0_45, %c0_46], %79 {strides = array<i32>} : memref<2x8x384xf32, #tpu.memory_space<vmem>>, vector<1x8x384xf32>,
    return
  }
  func.func @transform_0(%arg0: i32) -> (i32, i32, i32) {
    %c0_i32 = arith.constant 0 : i32
    %c0_i32_0 = arith.constant 0 : i32
    %c0_i32_1 = arith.constant 0 : i32
    return %arg0, %c0_i32, %c0_i32_0 : i32, i32, i32
  }
  func.func @transform_1(%arg0: i32) -> (i32, i32) {
    %c0_i32 = arith.constant 0 : i32
    %c0_i32_0 = arith.constant 0 : i32
    %c0_i32_1 = arith.constant 0 : i32
    return %c0_i32, %c0_i32_0 : i32, i32
  }
  func.func @transform_2(%arg0: i32) -> (i32, i32) {
    %c0_i32 = arith.constant 0 : i32
    %c0_i32_0 = arith.constant 0 : i32
    %c0_i32_1 = arith.constant 0 : i32
    return %c0_i32, %c0_i32_0 : i32, i32
  }
  func.func @transform_3(%arg0: i32) -> (i32, i32) {
    %c0_i32 = arith.constant 0 : i32
    %c0_i32_0 = arith.constant 0 : i32
    %c0_i32_1 = arith.constant 0 : i32
    return %c0_i32, %c0_i32_0 : i32, i32
  }
  func.func @transform_4(%arg0: i32) -> (i32, i32) {
    %c0_i32 = arith.constant 0 : i32
    %c0_i32_0 = arith.constant 0 : i32
    %c0_i32_1 = arith.constant 0 : i32
    return %c0_i32, %c0_i32_0 : i32, i32
  }
  func.func @transform_5(%arg0: i32) -> (i32, i32) {
    %c0_i32 = arith.constant 0 : i32
    %c0_i32_0 = arith.constant 0 : i32
    %c0_i32_1 = arith.constant 0 : i32
    return %c0_i32, %c0_i32_0 : i32, i32
  }
  func.func @transform_6(%arg0: i32) -> (i32, i32) {
    %c0_i32 = arith.constant 0 : i32
    %c0_i32_0 = arith.constant 0 : i32
    %c0_i32_1 = arith.constant 0 : i32
    return %c0_i32, %c0_i32_0 : i32, i32
  }
  func.func @transform_7(%arg0: i32) -> (i32, i32, i32) {
    %c0_i32 = arith.constant 0 : i32
    %c0_i32_0 = arith.constant 0 : i32
    %c0_i32_1 = arith.constant 0 : i32
    return %arg0, %c0_i32, %c0_i32_0 : i32, i32, i32
  }
}

</mosaic_0001>

<llo_original>
// kernel: tpu_custom_call.1
$region0: #{tpu_custom_call.1}
  #allocation0 [shape = 'u32[]', space=smem, size = 0x4, offset = 0x4, fixed_abs, tag = 'smem constant byte address 0x4 - core index']
  #allocation1 [shape = 'u32[72,128]{1,0:T(1,128)}', space=vmem, size = 0x9000, scoped, tag = 'internal scratch']
  %s0 = inlined_call_operand.hbm [shape: f32[2,8,384], index: 0, kind: input, shape index: {}]
  %s1 = inlined_call_operand.hbm [shape: f32[1,384], index: 1, kind: input, shape index: {}]
  %s2 = inlined_call_operand.vmem [shape: f32[8,72], index: 2, kind: input, shape index: {}]
  %s3 = inlined_call_operand.vmem [shape: f32[8,1], index: 3, kind: input, shape index: {}]
  %s4 = inlined_call_operand.vmem [shape: f32[8,72], index: 4, kind: input, shape index: {}]
  %s5 = inlined_call_operand.vmem [shape: f32[8,1], index: 5, kind: input, shape index: {}]
  %s6 = inlined_call_operand.hbm [shape: f32[8,8], index: 6, kind: input, shape index: {}]
  %s7 = inlined_call_operand.hbm [shape: f32[2,8,384], index: 7, kind: output, shape index: {}]
  %s8 = sld [smem:[#allocation0]]
  $region50: #{tpu_custom_call.1} parent=0
    _
  %s10 = ssub.s32 1, %s8
  %s11 = scalar_select 0, %s10, %s8
  $region1: #{tpu_custom_call.1} parent=0
    #allocation2 [shape = 'u8[24576]{0}', space=vmem, size = 0x6000, scoped, tag = 'input window, operand 0, single buffered']
    #allocation3 [shape = 's32[1]{0}', space=sflag, size = 0x4, scoped, tag = 'scoped memory for tpu_custom_call.1']
    #allocation4 [shape = 's32[1]{0}', space=sflag, size = 0x4, scoped, tag = 'scoped memory for tpu_custom_call.1']
    #allocation5 [shape = 'u8[1536]{0}', space=vmem, size = 0x800, scoped, tag = 'input window, operand 1, single buffered']
    #allocation6 [shape = 's32[1]{0}', space=sflag, size = 0x4, scoped, tag = 'scoped memory for tpu_custom_call.1']
    #allocation7 [shape = 'u8[4096]{0}', space=vmem, size = 0x1000, scoped, tag = 'input window, operand 6, single buffered']
    #allocation8 [shape = 'u8[24576]{0}', space=vmem, size = 0x6000, scoped, tag = 'output window, operand 0, single buffered']
    %12 = vsyncpa [#allocation3], 0
    %13 = vsyncpa [#allocation6], 0
    %14 = vsyncpa [#allocation4], 0
    // Predicated region
    $region2: #{tpu_custom_call.1} parent=1 // pred_check
      _
    $region3: #{tpu_custom_call.1} parent=1 // pred_check_branch
      %16 = sbr.rel (0) target = $region5
    $region4: #{tpu_custom_call.1} parent=1 // pred_region
      %18 = vsyncadd [#allocation3], 0
      %s19 = sshll.u32 %s0, 4
      %s20 = int_to_ptr.hbm [resolvable:$true] %s19
      %s21 = sshll.u32 [#allocation2], 4
      %s22 = int_to_ptr.vmem [resolvable:$true] %s21
      %27 = dma.hbm_to_vmem [thread:$0]  %s20, 768, %s22, [#allocation3], 384, 384, 24
    $region5: #{tpu_custom_call.1} parent=1 // pred_fallthru
      _
    // Predicated region
    $region6: #{tpu_custom_call.1} parent=1 // pred_check
      _
    $region7: #{tpu_custom_call.1} parent=1 // pred_check_branch
      %29 = sbr.rel (0) target = $region9
    $region8: #{tpu_custom_call.1} parent=1 // pred_region
      %31 = vsyncadd [#allocation6], 0
      %s33 = sshll.u32 %s1, 4
      %s34 = int_to_ptr.hbm [resolvable:$true] %s33
      %s35 = sshll.u32 [#allocation5], 4
      %s36 = int_to_ptr.vmem [resolvable:$true] %s35
      %38 = dma.hbm_to_vmem [thread:$0]  %s34, 48, %s36, [#allocation6]
    $region9: #{tpu_custom_call.1} parent=1 // pred_fallthru
      _
    // Predicated region
    $region10: #{tpu_custom_call.1} parent=1 // pred_check
      _
    $region11: #{tpu_custom_call.1} parent=1 // pred_check_branch
      %40 = sbr.rel (0) target = $region13
    $region12: #{tpu_custom_call.1} parent=1 // pred_region
      _
    $region13: #{tpu_custom_call.1} parent=1 // pred_fallthru
      _
    // Predicated region
    $region14: #{tpu_custom_call.1} parent=1 // pred_check
      _
    $region15: #{tpu_custom_call.1} parent=1 // pred_check_branch
      %42 = sbr.rel (0) target = $region17
    $region16: #{tpu_custom_call.1} parent=1 // pred_region
      _
    $region17: #{tpu_custom_call.1} parent=1 // pred_fallthru
      _
    // Predicated region
    $region18: #{tpu_custom_call.1} parent=1 // pred_check
      _
    $region19: #{tpu_custom_call.1} parent=1 // pred_check_branch
      %44 = sbr.rel (0) target = $region21
    $region20: #{tpu_custom_call.1} parent=1 // pred_region
      _
    $region21: #{tpu_custom_call.1} parent=1 // pred_fallthru
      _
    // Predicated region
    $region22: #{tpu_custom_call.1} parent=1 // pred_check
      _
    $region23: #{tpu_custom_call.1} parent=1 // pred_check_branch
      %46 = sbr.rel (0) target = $region25
    $region24: #{tpu_custom_call.1} parent=1 // pred_region
      _
    $region25: #{tpu_custom_call.1} parent=1 // pred_fallthru
      _
    // Predicated region
    $region26: #{tpu_custom_call.1} parent=1 // pred_check
      _
    $region27: #{tpu_custom_call.1} parent=1 // pred_check_branch
      %48 = sbr.rel (0) target = $region29
    $region28: #{tpu_custom_call.1} parent=1 // pred_region
      %50 = vsyncadd [#allocation6], 0
      %s52 = sshll.u32 %s6, 4
      %s53 = int_to_ptr.hbm [resolvable:$true] %s52
      %s54 = sshll.u32 [#allocation7], 4
      %s55 = int_to_ptr.vmem [resolvable:$true] %s54
      %57 = dma.hbm_to_vmem [thread:$0]  %s53, 128, %s55, [#allocation6]
    $region29: #{tpu_custom_call.1} parent=1 // pred_fallthru
      _
    // Predicated region
    $region30: #{tpu_custom_call.1} parent=1 // pred_check
      _
    $region31: #{tpu_custom_call.1} parent=1 // pred_check_branch
      %59 = sbr.rel (0) target = $region33
    $region32: #{tpu_custom_call.1} parent=1 // pred_region
      %61 = dma.done [#allocation3], 768
    $region33: #{tpu_custom_call.1} parent=1 // pred_fallthru
      _
    // Predicated region
    $region34: #{tpu_custom_call.1} parent=1 // pred_check
      _
    $region35: #{tpu_custom_call.1} parent=1 // pred_check_branch
      %63 = sbr.rel (0) target = $region37
    $region36: #{tpu_custom_call.1} parent=1 // pred_region
      %65 = dma.done [#allocation6], 48
    $region37: #{tpu_custom_call.1} parent=1 // pred_fallthru
      _
    // Predicated region
    $region38: #{tpu_custom_call.1} parent=1 // pred_check
      _
    $region39: #{tpu_custom_call.1} parent=1 // pred_check_branch
      %67 = sbr.rel (0) target = $region41
    $region40: #{tpu_custom_call.1} parent=1 // pred_region
      %69 = dma.done [#allocation6], 128
    $region41: #{tpu_custom_call.1} parent=1 // pred_fallthru
      _
    %v70 = vld [vmem:[#allocation5] sm:$0x7]
    %v71 = vld [vmem:[%s2] sm:$0xff]
    %v72 = vld [vmem:[%s4] sm:$0xff]
    %v73 = vld [vmem:[%s3] sm:$0xff]
    %v74 = vld [vmem:[%s5] sm:$0xff]
    %v75 = vld [vmem:[#allocation7] sm:$0xff]
    %v76 = vld [vmem:[#allocation2] sm:$0xff]
    %v77 = vld [vmem:[#allocation2 + $0x8] sm:$0xff]
    %v78 = vld [vmem:[#allocation2 + $0x10] sm:$0xff]
    %79 = vrot.lane.b32.xlu0 %v76, 19
    %v80 = vpop.permute.xlu0 %79
    %81 = vrot.lane.b32.xlu0 %v77, 19
    %v82 = vpop.permute.xlu0 %81
    %83 = vrot.lane.b32.xlu0 %v78, 19
    %v84 = vpop.permute.xlu0 %83
    %v85 = vlaneseq
    %v86 = vand.u32 %v85, 127
    %vm87 = vcmp.lt.s32.totalorder %v86, 19
    %v88 = vsel %vm87, %v82, %v84
    %v89 = vsel %vm87, %v80, %v82
    %v90 = vsel %vm87, %v84, %v80
    %91 = vrot.lane.b32.xlu0 %v76, 18
    %v92 = vpop.permute.xlu0 %91
    %93 = vrot.lane.b32.xlu0 %v77, 18
    %v94 = vpop.permute.xlu0 %93
    %95 = vrot.lane.b32.xlu0 %v78, 18
    %v96 = vpop.permute.xlu0 %95
    %vm97 = vcmp.lt.s32.totalorder %v86, 18
    %v98 = vsel %vm97, %v94, %v96
    %v99 = vsel %vm97, %v92, %v94
    %v100 = vsel %vm97, %v96, %v92
    %101 = vrot.lane.b32.xlu0 %v76, 17
    %v102 = vpop.permute.xlu0 %101
    %103 = vrot.lane.b32.xlu0 %v77, 17
    %v104 = vpop.permute.xlu0 %103
    %105 = vrot.lane.b32.xlu0 %v78, 17
    %v106 = vpop.permute.xlu0 %105
    %vm107 = vcmp.lt.s32.totalorder %v86, 17
    %v108 = vsel %vm107, %v104, %v106
    %v109 = vsel %vm107, %v102, %v104
    %v110 = vsel %vm107, %v106, %v102
    %111 = vrot.lane.b32.xlu0 %v76, 1
    %v112 = vpop.permute.xlu0 %111
    %113 = vrot.lane.b32.xlu0 %v77, 1
    %v114 = vpop.permute.xlu0 %113
    %115 = vrot.lane.b32.xlu0 %v78, 1
    %v116 = vpop.permute.xlu0 %115
    %vm117 = vcmp.lt.s32.totalorder %v86, 1
    %v118 = vsel %vm117, %v114, %v116
    %v119 = vsel %vm117, %v112, %v114
    %v120 = vsel %vm117, %v116, %v112
    %121 = vrot.lane.b32.xlu0 %v76, 127
    %v122 = vpop.permute.xlu0 %121
    %123 = vrot.lane.b32.xlu0 %v77, 127
    %v124 = vpop.permute.xlu0 %123
    %125 = vrot.lane.b32.xlu0 %v78, 127
    %v126 = vpop.permute.xlu0 %125
    %vm127 = vcmp.lt.s32.totalorder %v86, 127
    %v128 = vsel %vm127, %v124, %v126
    %v129 = vsel %vm127, %v122, %v124
    %v130 = vsel %vm127, %v126, %v122
    %131 = vrot.lane.b32.xlu0 %v76, 111
    %v132 = vpop.permute.xlu0 %131
    %133 = vrot.lane.b32.xlu0 %v77, 111
    %v134 = vpop.permute.xlu0 %133
    %135 = vrot.lane.b32.xlu0 %v78, 111
    %v136 = vpop.permute.xlu0 %135
    %vm137 = vcmp.lt.s32.totalorder %v86, 111
    %v138 = vsel %vm137, %v134, %v136
    %v139 = vsel %vm137, %v132, %v134
    %v140 = vsel %vm137, %v136, %v132
    %141 = vrot.lane.b32.xlu0 %v76, 110
    %v142 = vpop.permute.xlu0 %141
    %143 = vrot.lane.b32.xlu0 %v77, 110
    %v144 = vpop.permute.xlu0 %143
    %145 = vrot.lane.b32.xlu0 %v78, 110
    %v146 = vpop.permute.xlu0 %145
    %vm147 = vcmp.lt.s32.totalorder %v86, 110
    %v148 = vsel %vm147, %v144, %v146
    %v149 = vsel %vm147, %v142, %v144
    %v150 = vsel %vm147, %v146, %v142
    %151 = vrot.lane.b32.xlu0 %v76, 109
    %v152 = vpop.permute.xlu0 %151
    %153 = vrot.lane.b32.xlu0 %v77, 109
    %v154 = vpop.permute.xlu0 %153
    %155 = vrot.lane.b32.xlu0 %v78, 109
    %v156 = vpop.permute.xlu0 %155
    %vm157 = vcmp.lt.s32.totalorder %v86, 109
    %v158 = vsel %vm157, %v154, %v156
    %v159 = vsel %vm157, %v152, %v154
    %v160 = vsel %vm157, %v156, %v152
    %162 = vset.pattern.permute.xlu0 0
    %163 = vperm.xlu0 %162, %v73
    %v164 = vpop.permute.xlu0 %163
    %vm166 = vcmask 588800
    %v168 = vsel %vm166, %v71, 0
    %170 = vmatpush.msra.mxu0 0.0
    %171 = vmatpush.msra.mxu0 0.0
    %172 = vmatpush.msra.mxu0 0.0
    %173 = vmatpush.msra.mxu0 0.0
    %174 = vmatpush.msra.mxu0 0.0
    %175 = vmatpush.msra.mxu0 0.0
    %176 = vmatpush.msra.mxu0 0.0
    %177 = vmatpush.msra.mxu0 %v159
    %178 = vmatpush.msra.mxu0 %v149
    %179 = vmatpush.msra.mxu0 %v139
    %180 = vmatpush.msra.mxu0 %v129
    %181 = vmatpush.msra.mxu0 %v76
    %182 = vmatpush.msra.mxu0 %v120
    %183 = vmatpush.msra.mxu0 %v110
    %184 = vmatpush.msra.mxu0 %v100
    %185 = vmatpush.msra.mxu0 %v90
    %186 = vmatmul.f32.gmra.mxu0 %v168
    %v187 = vpop.f32.mrf.mxu0
    %v188 = vadd.f32 %v164, %v187
    %189 = vdwg.mxu0
    %190 = vmatpush.msra.mxu0 0.0
    %191 = vmatpush.msra.mxu0 0.0
    %192 = vmatpush.msra.mxu0 0.0
    %193 = vmatpush.msra.mxu0 0.0
    %194 = vmatpush.msra.mxu0 0.0
    %195 = vmatpush.msra.mxu0 0.0
    %196 = vmatpush.msra.mxu0 0.0
    %197 = vmatpush.msra.mxu0 %v158
    %198 = vmatpush.msra.mxu0 %v148
    %199 = vmatpush.msra.mxu0 %v138
    %200 = vmatpush.msra.mxu0 %v128
    %201 = vmatpush.msra.mxu0 %v77
    %202 = vmatpush.msra.mxu0 %v119
    %203 = vmatpush.msra.mxu0 %v109
    %204 = vmatpush.msra.mxu0 %v99
    %205 = vmatpush.msra.mxu0 %v89
    %206 = vmatmul.f32.gmra.mxu0 %v168
    %v207 = vpop.f32.mrf.mxu0
    %v208 = vadd.f32 %v164, %v207
    %209 = vdwg.mxu0
    %210 = vmatpush.msra.mxu0 0.0
    %211 = vmatpush.msra.mxu0 0.0
    %212 = vmatpush.msra.mxu0 0.0
    %213 = vmatpush.msra.mxu0 0.0
    %214 = vmatpush.msra.mxu0 0.0
    %215 = vmatpush.msra.mxu0 0.0
    %216 = vmatpush.msra.mxu0 0.0
    %217 = vmatpush.msra.mxu0 %v160
    %218 = vmatpush.msra.mxu0 %v150
    %219 = vmatpush.msra.mxu0 %v140
    %220 = vmatpush.msra.mxu0 %v130
    %221 = vmatpush.msra.mxu0 %v78
    %222 = vmatpush.msra.mxu0 %v118
    %223 = vmatpush.msra.mxu0 %v108
    %224 = vmatpush.msra.mxu0 %v98
    %225 = vmatpush.msra.mxu0 %v88
    %226 = vmatmul.f32.gmra.mxu0 %v168
    %v227 = vpop.f32.mrf.mxu0
    %v228 = vadd.f32 %v164, %v227
    %229 = vdwg.mxu0
    %v230 = vmax.f32 %v188, 0.0
    %v231 = vmax.f32 %v208, 0.0
    %v232 = vmax.f32 %v228, 0.0
    %v234 = vperm.slane %v70, 0
    %v235 = vperm.slane %v70, 1
    %v236 = vperm.slane %v70, 2
    %v240 = vmul.f32 %v230, %v234
    %v241 = vmul.f32 %v231, %v235
    %v242 = vmul.f32 %v232, %v236
    %243 = vrot.lane.b32.xlu0 %v240, 38
    %v244 = vpop.permute.xlu0 %243
    %245 = vrot.lane.b32.xlu0 %v241, 38
    %v246 = vpop.permute.xlu0 %245
    %247 = vrot.lane.b32.xlu0 %v242, 38
    %v248 = vpop.permute.xlu0 %247
    %vm249 = vcmp.lt.s32.totalorder %v86, 38
    %v250 = vsel %vm249, %v246, %v248
    %v251 = vsel %vm249, %v244, %v246
    %v252 = vsel %vm249, %v248, %v244
    %253 = vrot.lane.b32.xlu0 %v240, 36
    %v254 = vpop.permute.xlu0 %253
    %255 = vrot.lane.b32.xlu0 %v241, 36
    %v256 = vpop.permute.xlu0 %255
    %257 = vrot.lane.b32.xlu0 %v242, 36
    %v258 = vpop.permute.xlu0 %257
    %vm259 = vcmp.lt.s32.totalorder %v86, 36
    %v260 = vsel %vm259, %v256, %v258
    %v261 = vsel %vm259, %v254, %v256
    %v262 = vsel %vm259, %v258, %v254
    %263 = vrot.lane.b32.xlu0 %v240, 34
    %v264 = vpop.permute.xlu0 %263
    %265 = vrot.lane.b32.xlu0 %v241, 34
    %v266 = vpop.permute.xlu0 %265
    %267 = vrot.lane.b32.xlu0 %v242, 34
    %v268 = vpop.permute.xlu0 %267
    %vm269 = vcmp.lt.s32.totalorder %v86, 34
    %v270 = vsel %vm269, %v266, %v268
    %v271 = vsel %vm269, %v264, %v266
    %v272 = vsel %vm269, %v268, %v264
    %273 = vrot.lane.b32.xlu0 %v240, 2
    %v274 = vpop.permute.xlu0 %273
    %275 = vrot.lane.b32.xlu0 %v241, 2
    %v276 = vpop.permute.xlu0 %275
    %277 = vrot.lane.b32.xlu0 %v242, 2
    %v278 = vpop.permute.xlu0 %277
    %vm279 = vcmp.lt.s32.totalorder %v86, 2
    %v280 = vsel %vm279, %v276, %v278
    %v281 = vsel %vm279, %v274, %v276
    %v282 = vsel %vm279, %v278, %v274
    %283 = vrot.lane.b32.xlu0 %v240, 126
    %v284 = vpop.permute.xlu0 %283
    %285 = vrot.lane.b32.xlu0 %v241, 126
    %v286 = vpop.permute.xlu0 %285
    %287 = vrot.lane.b32.xlu0 %v242, 126
    %v288 = vpop.permute.xlu0 %287
    %vm289 = vcmp.lt.s32.totalorder %v86, 126
    %v290 = vsel %vm289, %v286, %v288
    %v291 = vsel %vm289, %v284, %v286
    %v292 = vsel %vm289, %v288, %v284
    %293 = vrot.lane.b32.xlu0 %v240, 94
    %v294 = vpop.permute.xlu0 %293
    %295 = vrot.lane.b32.xlu0 %v241, 94
    %v296 = vpop.permute.xlu0 %295
    %297 = vrot.lane.b32.xlu0 %v242, 94
    %v298 = vpop.permute.xlu0 %297
    %vm299 = vcmp.lt.s32.totalorder %v86, 94
    %v300 = vsel %vm299, %v296, %v298
    %v301 = vsel %vm299, %v294, %v296
    %v302 = vsel %vm299, %v298, %v294
    %303 = vrot.lane.b32.xlu0 %v240, 92
    %v304 = vpop.permute.xlu0 %303
    %305 = vrot.lane.b32.xlu0 %v241, 92
    %v306 = vpop.permute.xlu0 %305
    %307 = vrot.lane.b32.xlu0 %v242, 92
    %v308 = vpop.permute.xlu0 %307
    %vm309 = vcmp.lt.s32.totalorder %v86, 92
    %v310 = vsel %vm309, %v306, %v308
    %v311 = vsel %vm309, %v304, %v306
    %v312 = vsel %vm309, %v308, %v304
    %313 = vrot.lane.b32.xlu0 %v240, 90
    %v314 = vpop.permute.xlu0 %313
    %315 = vrot.lane.b32.xlu0 %v241, 90
    %v316 = vpop.permute.xlu0 %315
    %317 = vrot.lane.b32.xlu0 %v242, 90
    %v318 = vpop.permute.xlu0 %317
    %vm319 = vcmp.lt.s32.totalorder %v86, 90
    %v320 = vsel %vm319, %v316, %v318
    %v321 = vsel %vm319, %v314, %v316
    %v322 = vsel %vm319, %v318, %v314
    %324 = vset.pattern.permute.xlu0 0
    %325 = vperm.xlu0 %324, %v74
    %v326 = vpop.permute.xlu0 %325
    %v329 = vsel %vm166, %v72, 0
    %331 = vmatpush.msra.mxu0 0.0
    %332 = vmatpush.msra.mxu0 0.0
    %333 = vmatpush.msra.mxu0 0.0
    %334 = vmatpush.msra.mxu0 0.0
    %335 = vmatpush.msra.mxu0 0.0
    %336 = vmatpush.msra.mxu0 0.0
    %337 = vmatpush.msra.mxu0 0.0
    %338 = vmatpush.msra.mxu0 %v321
    %339 = vmatpush.msra.mxu0 %v311
    %340 = vmatpush.msra.mxu0 %v301
    %341 = vmatpush.msra.mxu0 %v291
    %342 = vmatpush.msra.mxu0 %v240
    %343 = vmatpush.msra.mxu0 %v282
    %344 = vmatpush.msra.mxu0 %v272
    %345 = vmatpush.msra.mxu0 %v262
    %346 = vmatpush.msra.mxu0 %v252
    %347 = vmatmul.f32.gmra.mxu0 %v329
    %v348 = vpop.f32.mrf.mxu0
    %v349 = vadd.f32 %v326, %v348
    %350 = vdwg.mxu0
    %351 = vmatpush.msra.mxu0 0.0
    %352 = vmatpush.msra.mxu0 0.0
    %353 = vmatpush.msra.mxu0 0.0
    %354 = vmatpush.msra.mxu0 0.0
    %355 = vmatpush.msra.mxu0 0.0
    %356 = vmatpush.msra.mxu0 0.0
    %357 = vmatpush.msra.mxu0 0.0
    %358 = vmatpush.msra.mxu0 %v320
    %359 = vmatpush.msra.mxu0 %v310
    %360 = vmatpush.msra.mxu0 %v300
    %361 = vmatpush.msra.mxu0 %v290
    %362 = vmatpush.msra.mxu0 %v241
    %363 = vmatpush.msra.mxu0 %v281
    %364 = vmatpush.msra.mxu0 %v271
    %365 = vmatpush.msra.mxu0 %v261
    %366 = vmatpush.msra.mxu0 %v251
    %367 = vmatmul.f32.gmra.mxu0 %v329
    %v368 = vpop.f32.mrf.mxu0
    %v369 = vadd.f32 %v326, %v368
    %370 = vdwg.mxu0
    %371 = vmatpush.msra.mxu0 0.0
    %372 = vmatpush.msra.mxu0 0.0
    %373 = vmatpush.msra.mxu0 0.0
    %374 = vmatpush.msra.mxu0 0.0
    %375 = vmatpush.msra.mxu0 0.0
    %376 = vmatpush.msra.mxu0 0.0
    %377 = vmatpush.msra.mxu0 0.0
    %378 = vmatpush.msra.mxu0 %v322
    %379 = vmatpush.msra.mxu0 %v312
    %380 = vmatpush.msra.mxu0 %v302
    %381 = vmatpush.msra.mxu0 %v292
    %382 = vmatpush.msra.mxu0 %v242
    %383 = vmatpush.msra.mxu0 %v280
    %384 = vmatpush.msra.mxu0 %v270
    %385 = vmatpush.msra.mxu0 %v260
    %386 = vmatpush.msra.mxu0 %v250
    %387 = vmatmul.f32.gmra.mxu0 %v329
    %v388 = vpop.f32.mrf.mxu0
    %v389 = vadd.f32 %v326, %v388
    %390 = vdwg.mxu0
    %vm391 = vcmask 64512
    %v393 = vsel %vm391, %v75, 0
    %395 = vmatpush.msra.mxu0 0.0
    %396 = vmatpush.msra.mxu0 0.0
    %397 = vmatpush.msra.mxu0 0.0
    %398 = vmatpush.msra.mxu0 0.0
    %399 = vmatpush.msra.mxu0 0.0
    %400 = vmatpush.msra.mxu0 0.0
    %401 = vmatpush.msra.mxu0 0.0
    %402 = vmatpush.msra.mxu0 0.0
    %403 = vmatpush.msra.mxu0 0.0
    %404 = vmatpush.msra.mxu0 0.0
    %405 = vmatpush.msra.mxu0 0.0
    %406 = vmatpush.msra.mxu0 0.0
    %407 = vmatpush.msra.mxu0 0.0
    %408 = vmatpush.msra.mxu0 0.0
    %409 = vmatpush.msra.mxu0 0.0
    %410 = vmatpush.msra.mxu0 %v76
    %411 = vmatmul.f32.gmra.mxu0 %v393
    %v412 = vpop.f32.mrf.mxu0
    %v413 = vadd.f32 0.0, %v412
    %414 = vdwg.mxu0
    %415 = vmatpush.msra.mxu0 0.0
    %416 = vmatpush.msra.mxu0 0.0
    %417 = vmatpush.msra.mxu0 0.0
    %418 = vmatpush.msra.mxu0 0.0
    %419 = vmatpush.msra.mxu0 0.0
    %420 = vmatpush.msra.mxu0 0.0
    %421 = vmatpush.msra.mxu0 0.0
    %422 = vmatpush.msra.mxu0 0.0
    %423 = vmatpush.msra.mxu0 0.0
    %424 = vmatpush.msra.mxu0 0.0
    %425 = vmatpush.msra.mxu0 0.0
    %426 = vmatpush.msra.mxu0 0.0
    %427 = vmatpush.msra.mxu0 0.0
    %428 = vmatpush.msra.mxu0 0.0
    %429 = vmatpush.msra.mxu0 0.0
    %430 = vmatpush.msra.mxu0 %v77
    %431 = vmatmul.f32.gmra.mxu0 %v393
    %v432 = vpop.f32.mrf.mxu0
    %v433 = vadd.f32 0.0, %v432
    %434 = vdwg.mxu0
    %435 = vmatpush.msra.mxu0 0.0
    %436 = vmatpush.msra.mxu0 0.0
    %437 = vmatpush.msra.mxu0 0.0
    %438 = vmatpush.msra.mxu0 0.0
    %439 = vmatpush.msra.mxu0 0.0
    %440 = vmatpush.msra.mxu0 0.0
    %441 = vmatpush.msra.mxu0 0.0
    %442 = vmatpush.msra.mxu0 0.0
    %443 = vmatpush.msra.mxu0 0.0
    %444 = vmatpush.msra.mxu0 0.0
    %445 = vmatpush.msra.mxu0 0.0
    %446 = vmatpush.msra.mxu0 0.0
    %447 = vmatpush.msra.mxu0 0.0
    %448 = vmatpush.msra.mxu0 0.0
    %449 = vmatpush.msra.mxu0 0.0
    %450 = vmatpush.msra.mxu0 %v78
    %451 = vmatmul.f32.gmra.mxu0 %v393
    %v452 = vpop.f32.mrf.mxu0
    %v453 = vadd.f32 0.0, %v452
    %454 = vdwg.mxu0
    %v455 = vadd.f32 %v349, %v413
    %v456 = vadd.f32 %v369, %v433
    %v457 = vadd.f32 %v389, %v453
    %v458 = vmax.f32 %v455, 0.0
    %v459 = vmax.f32 %v456, 0.0
    %v460 = vmax.f32 %v457, 0.0
    %461 = vst [vmem:[#allocation8] sm:$0xff] %v458
    %462 = vst [vmem:[#allocation8 + $0x8] sm:$0xff] %v459
    %463 = vst [vmem:[#allocation8 + $0x10] sm:$0xff] %v460
    %s464 = scalar_lea.vmem [#allocation2], 24
    %v465 = vld [vmem:[%s464] sm:$0xff]
    %v466 = vld [vmem:[%s464 + $0x8] sm:$0xff]
    %v467 = vld [vmem:[%s464 + $0x10] sm:$0xff]
    %468 = vrot.lane.b32.xlu0 %v465, 19
    %v469 = vpop.permute.xlu0 %468
    %470 = vrot.lane.b32.xlu0 %v466, 19
    %v471 = vpop.permute.xlu0 %470
    %472 = vrot.lane.b32.xlu0 %v467, 19
    %v473 = vpop.permute.xlu0 %472
    %v474 = vsel %vm87, %v471, %v473
    %v475 = vsel %vm87, %v469, %v471
    %v476 = vsel %vm87, %v473, %v469
    %477 = vrot.lane.b32.xlu0 %v465, 18
    %v478 = vpop.permute.xlu0 %477
    %479 = vrot.lane.b32.xlu0 %v466, 18
    %v480 = vpop.permute.xlu0 %479
    %481 = vrot.lane.b32.xlu0 %v467, 18
    %v482 = vpop.permute.xlu0 %481
    %v483 = vsel %vm97, %v480, %v482
    %v484 = vsel %vm97, %v478, %v480
    %v485 = vsel %vm97, %v482, %v478
    %486 = vrot.lane.b32.xlu0 %v465, 17
    %v487 = vpop.permute.xlu0 %486
    %488 = vrot.lane.b32.xlu0 %v466, 17
    %v489 = vpop.permute.xlu0 %488
    %490 = vrot.lane.b32.xlu0 %v467, 17
    %v491 = vpop.permute.xlu0 %490
    %v492 = vsel %vm107, %v489, %v491
    %v493 = vsel %vm107, %v487, %v489
    %v494 = vsel %vm107, %v491, %v487
    %495 = vrot.lane.b32.xlu0 %v465, 1
    %v496 = vpop.permute.xlu0 %495
    %497 = vrot.lane.b32.xlu0 %v466, 1
    %v498 = vpop.permute.xlu0 %497
    %499 = vrot.lane.b32.xlu0 %v467, 1
    %v500 = vpop.permute.xlu0 %499
    %v501 = vsel %vm117, %v498, %v500
    %v502 = vsel %vm117, %v496, %v498
    %v503 = vsel %vm117, %v500, %v496
    %504 = vrot.lane.b32.xlu0 %v465, 127
    %v505 = vpop.permute.xlu0 %504
    %506 = vrot.lane.b32.xlu0 %v466, 127
    %v507 = vpop.permute.xlu0 %506
    %508 = vrot.lane.b32.xlu0 %v467, 127
    %v509 = vpop.permute.xlu0 %508
    %v510 = vsel %vm127, %v507, %v509
    %v511 = vsel %vm127, %v505, %v507
    %v512 = vsel %vm127, %v509, %v505
    %513 = vrot.lane.b32.xlu0 %v465, 111
    %v514 = vpop.permute.xlu0 %513
    %515 = vrot.lane.b32.xlu0 %v466, 111
    %v516 = vpop.permute.xlu0 %515
    %517 = vrot.lane.b32.xlu0 %v467, 111
    %v518 = vpop.permute.xlu0 %517
    %v519 = vsel %vm137, %v516, %v518
    %v520 = vsel %vm137, %v514, %v516
    %v521 = vsel %vm137, %v518, %v514
    %522 = vrot.lane.b32.xlu0 %v465, 110
    %v523 = vpop.permute.xlu0 %522
    %524 = vrot.lane.b32.xlu0 %v466, 110
    %v525 = vpop.permute.xlu0 %524
    %526 = vrot.lane.b32.xlu0 %v467, 110
    %v527 = vpop.permute.xlu0 %526
    %v528 = vsel %vm147, %v525, %v527
    %v529 = vsel %vm147, %v523, %v525
    %v530 = vsel %vm147, %v527, %v523
    %531 = vrot.lane.b32.xlu0 %v465, 109
    %v532 = vpop.permute.xlu0 %531
    %533 = vrot.lane.b32.xlu0 %v466, 109
    %v534 = vpop.permute.xlu0 %533
    %535 = vrot.lane.b32.xlu0 %v467, 109
    %v536 = vpop.permute.xlu0 %535
    %v537 = vsel %vm157, %v534, %v536
    %v538 = vsel %vm157, %v532, %v534
    %v539 = vsel %vm157, %v536, %v532
    %540 = vmatpush.msra.mxu0 0.0
    %541 = vmatpush.msra.mxu0 0.0
    %542 = vmatpush.msra.mxu0 0.0
    %543 = vmatpush.msra.mxu0 0.0
    %544 = vmatpush.msra.mxu0 0.0
    %545 = vmatpush.msra.mxu0 0.0
    %546 = vmatpush.msra.mxu0 0.0
    %547 = vmatpush.msra.mxu0 %v538
    %548 = vmatpush.msra.mxu0 %v529
    %549 = vmatpush.msra.mxu0 %v520
    %550 = vmatpush.msra.mxu0 %v511
    %551 = vmatpush.msra.mxu0 %v465
    %552 = vmatpush.msra.mxu0 %v503
    %553 = vmatpush.msra.mxu0 %v494
    %554 = vmatpush.msra.mxu0 %v485
    %555 = vmatpush.msra.mxu0 %v476
    %556 = vmatmul.f32.gmra.mxu0 %v168
    %v557 = vpop.f32.mrf.mxu0
    %v558 = vadd.f32 %v164, %v557
    %559 = vdwg.mxu0
    %560 = vmatpush.msra.mxu0 0.0
    %561 = vmatpush.msra.mxu0 0.0
    %562 = vmatpush.msra.mxu0 0.0
    %563 = vmatpush.msra.mxu0 0.0
    %564 = vmatpush.msra.mxu0 0.0
    %565 = vmatpush.msra.mxu0 0.0
    %566 = vmatpush.msra.mxu0 0.0
    %567 = vmatpush.msra.mxu0 %v537
    %568 = vmatpush.msra.mxu0 %v528
    %569 = vmatpush.msra.mxu0 %v519
    %570 = vmatpush.msra.mxu0 %v510
    %571 = vmatpush.msra.mxu0 %v466
    %572 = vmatpush.msra.mxu0 %v502
    %573 = vmatpush.msra.mxu0 %v493
    %574 = vmatpush.msra.mxu0 %v484
    %575 = vmatpush.msra.mxu0 %v475
    %576 = vmatmul.f32.gmra.mxu0 %v168
    %v577 = vpop.f32.mrf.mxu0
    %v578 = vadd.f32 %v164, %v577
    %579 = vdwg.mxu0
    %580 = vmatpush.msra.mxu0 0.0
    %581 = vmatpush.msra.mxu0 0.0
    %582 = vmatpush.msra.mxu0 0.0
    %583 = vmatpush.msra.mxu0 0.0
    %584 = vmatpush.msra.mxu0 0.0
    %585 = vmatpush.msra.mxu0 0.0
    %586 = vmatpush.msra.mxu0 0.0
    %587 = vmatpush.msra.mxu0 %v539
    %588 = vmatpush.msra.mxu0 %v530
    %589 = vmatpush.msra.mxu0 %v521
    %590 = vmatpush.msra.mxu0 %v512
    %591 = vmatpush.msra.mxu0 %v467
    %592 = vmatpush.msra.mxu0 %v501
    %593 = vmatpush.msra.mxu0 %v492
    %594 = vmatpush.msra.mxu0 %v483
    %595 = vmatpush.msra.mxu0 %v474
    %596 = vmatmul.f32.gmra.mxu0 %v168
    %v597 = vpop.f32.mrf.mxu0
    %v598 = vadd.f32 %v164, %v597
    %599 = vdwg.mxu0
    %v600 = vmax.f32 %v558, 0.0
    %v601 = vmax.f32 %v578, 0.0
    %v602 = vmax.f32 %v598, 0.0
    %v603 = vmul.f32 %v600, %v234
    %v604 = vmul.f32 %v601, %v235
    %v605 = vmul.f32 %v602, %v236
    %606 = vrot.lane.b32.xlu0 %v603, 38
    %v607 = vpop.permute.xlu0 %606
    %608 = vrot.lane.b32.xlu0 %v604, 38
    %v609 = vpop.permute.xlu0 %608
    %610 = vrot.lane.b32.xlu0 %v605, 38
    %v611 = vpop.permute.xlu0 %610
    %v612 = vsel %vm249, %v609, %v611
    %v613 = vsel %vm249, %v607, %v609
    %v614 = vsel %vm249, %v611, %v607
    %615 = vrot.lane.b32.xlu0 %v603, 36
    %v616 = vpop.permute.xlu0 %615
    %617 = vrot.lane.b32.xlu0 %v604, 36
    %v618 = vpop.permute.xlu0 %617
    %619 = vrot.lane.b32.xlu0 %v605, 36
    %v620 = vpop.permute.xlu0 %619
    %v621 = vsel %vm259, %v618, %v620
    %v622 = vsel %vm259, %v616, %v618
    %v623 = vsel %vm259, %v620, %v616
    %624 = vrot.lane.b32.xlu0 %v603, 34
    %v625 = vpop.permute.xlu0 %624
    %626 = vrot.lane.b32.xlu0 %v604, 34
    %v627 = vpop.permute.xlu0 %626
    %628 = vrot.lane.b32.xlu0 %v605, 34
    %v629 = vpop.permute.xlu0 %628
    %v630 = vsel %vm269, %v627, %v629
    %v631 = vsel %vm269, %v625, %v627
    %v632 = vsel %vm269, %v629, %v625
    %633 = vrot.lane.b32.xlu0 %v603, 2
    %v634 = vpop.permute.xlu0 %633
    %635 = vrot.lane.b32.xlu0 %v604, 2
    %v636 = vpop.permute.xlu0 %635
    %637 = vrot.lane.b32.xlu0 %v605, 2
    %v638 = vpop.permute.xlu0 %637
    %v639 = vsel %vm279, %v636, %v638
    %v640 = vsel %vm279, %v634, %v636
    %v641 = vsel %vm279, %v638, %v634
    %642 = vrot.lane.b32.xlu0 %v603, 126
    %v643 = vpop.permute.xlu0 %642
    %644 = vrot.lane.b32.xlu0 %v604, 126
    %v645 = vpop.permute.xlu0 %644
    %646 = vrot.lane.b32.xlu0 %v605, 126
    %v647 = vpop.permute.xlu0 %646
    %v648 = vsel %vm289, %v645, %v647
    %v649 = vsel %vm289, %v643, %v645
    %v650 = vsel %vm289, %v647, %v643
    %651 = vrot.lane.b32.xlu0 %v603, 94
    %v652 = vpop.permute.xlu0 %651
    %653 = vrot.lane.b32.xlu0 %v604, 94
    %v654 = vpop.permute.xlu0 %653
    %655 = vrot.lane.b32.xlu0 %v605, 94
    %v656 = vpop.permute.xlu0 %655
    %v657 = vsel %vm299, %v654, %v656
    %v658 = vsel %vm299, %v652, %v654
    %v659 = vsel %vm299, %v656, %v652
    %660 = vrot.lane.b32.xlu0 %v603, 92
    %v661 = vpop.permute.xlu0 %660
    %662 = vrot.lane.b32.xlu0 %v604, 92
    %v663 = vpop.permute.xlu0 %662
    %664 = vrot.lane.b32.xlu0 %v605, 92
    %v665 = vpop.permute.xlu0 %664
    %v666 = vsel %vm309, %v663, %v665
    %v667 = vsel %vm309, %v661, %v663
    %v668 = vsel %vm309, %v665, %v661
    %669 = vrot.lane.b32.xlu0 %v603, 90
    %v670 = vpop.permute.xlu0 %669
    %671 = vrot.lane.b32.xlu0 %v604, 90
    %v672 = vpop.permute.xlu0 %671
    %673 = vrot.lane.b32.xlu0 %v605, 90
    %v674 = vpop.permute.xlu0 %673
    %v675 = vsel %vm319, %v672, %v674
    %v676 = vsel %vm319, %v670, %v672
    %v677 = vsel %vm319, %v674, %v670
    %678 = vmatpush.msra.mxu0 0.0
    %679 = vmatpush.msra.mxu0 0.0
    %680 = vmatpush.msra.mxu0 0.0
    %681 = vmatpush.msra.mxu0 0.0
    %682 = vmatpush.msra.mxu0 0.0
    %683 = vmatpush.msra.mxu0 0.0
    %684 = vmatpush.msra.mxu0 0.0
    %685 = vmatpush.msra.mxu0 %v676
    %686 = vmatpush.msra.mxu0 %v667
    %687 = vmatpush.msra.mxu0 %v658
    %688 = vmatpush.msra.mxu0 %v649
    %689 = vmatpush.msra.mxu0 %v603
    %690 = vmatpush.msra.mxu0 %v641
    %691 = vmatpush.msra.mxu0 %v632
    %692 = vmatpush.msra.mxu0 %v623
    %693 = vmatpush.msra.mxu0 %v614
    %694 = vmatmul.f32.gmra.mxu0 %v329
    %v695 = vpop.f32.mrf.mxu0
    %v696 = vadd.f32 %v326, %v695
    %697 = vdwg.mxu0
    %698 = vmatpush.msra.mxu0 0.0
    %699 = vmatpush.msra.mxu0 0.0
    %700 = vmatpush.msra.mxu0 0.0
    %701 = vmatpush.msra.mxu0 0.0
    %702 = vmatpush.msra.mxu0 0.0
    %703 = vmatpush.msra.mxu0 0.0
    %704 = vmatpush.msra.mxu0 0.0
    %705 = vmatpush.msra.mxu0 %v675
    %706 = vmatpush.msra.mxu0 %v666
    %707 = vmatpush.msra.mxu0 %v657
    %708 = vmatpush.msra.mxu0 %v648
    %709 = vmatpush.msra.mxu0 %v604
    %710 = vmatpush.msra.mxu0 %v640
    %711 = vmatpush.msra.mxu0 %v631
    %712 = vmatpush.msra.mxu0 %v622
    %713 = vmatpush.msra.mxu0 %v613
    %714 = vmatmul.f32.gmra.mxu0 %v329
    %v715 = vpop.f32.mrf.mxu0
    %v716 = vadd.f32 %v326, %v715
    %717 = vdwg.mxu0
    %718 = vmatpush.msra.mxu0 0.0
    %719 = vmatpush.msra.mxu0 0.0
    %720 = vmatpush.msra.mxu0 0.0
    %721 = vmatpush.msra.mxu0 0.0
    %722 = vmatpush.msra.mxu0 0.0
    %723 = vmatpush.msra.mxu0 0.0
    %724 = vmatpush.msra.mxu0 0.0
    %725 = vmatpush.msra.mxu0 %v677
    %726 = vmatpush.msra.mxu0 %v668
    %727 = vmatpush.msra.mxu0 %v659
    %728 = vmatpush.msra.mxu0 %v650
    %729 = vmatpush.msra.mxu0 %v605
    %730 = vmatpush.msra.mxu0 %v639
    %731 = vmatpush.msra.mxu0 %v630
    %732 = vmatpush.msra.mxu0 %v621
    %733 = vmatpush.msra.mxu0 %v612
    %734 = vmatmul.f32.gmra.mxu0 %v329
    %v735 = vpop.f32.mrf.mxu0
    %v736 = vadd.f32 %v326, %v735
    %737 = vdwg.mxu0
    %738 = vmatpush.msra.mxu0 0.0
    %739 = vmatpush.msra.mxu0 0.0
    %740 = vmatpush.msra.mxu0 0.0
    %741 = vmatpush.msra.mxu0 0.0
    %742 = vmatpush.msra.mxu0 0.0
    %743 = vmatpush.msra.mxu0 0.0
    %744 = vmatpush.msra.mxu0 0.0
    %745 = vmatpush.msra.mxu0 0.0
    %746 = vmatpush.msra.mxu0 0.0
    %747 = vmatpush.msra.mxu0 0.0
    %748 = vmatpush.msra.mxu0 0.0
    %749 = vmatpush.msra.mxu0 0.0
    %750 = vmatpush.msra.mxu0 0.0
    %751 = vmatpush.msra.mxu0 0.0
    %752 = vmatpush.msra.mxu0 0.0
    %753 = vmatpush.msra.mxu0 %v465
    %754 = vmatmul.f32.gmra.mxu0 %v393
    %v755 = vpop.f32.mrf.mxu0
    %v756 = vadd.f32 0.0, %v755
    %757 = vdwg.mxu0
    %758 = vmatpush.msra.mxu0 0.0
    %759 = vmatpush.msra.mxu0 0.0
    %760 = vmatpush.msra.mxu0 0.0
    %761 = vmatpush.msra.mxu0 0.0
    %762 = vmatpush.msra.mxu0 0.0
    %763 = vmatpush.msra.mxu0 0.0
    %764 = vmatpush.msra.mxu0 0.0
    %765 = vmatpush.msra.mxu0 0.0
    %766 = vmatpush.msra.mxu0 0.0
    %767 = vmatpush.msra.mxu0 0.0
    %768 = vmatpush.msra.mxu0 0.0
    %769 = vmatpush.msra.mxu0 0.0
    %770 = vmatpush.msra.mxu0 0.0
    %771 = vmatpush.msra.mxu0 0.0
    %772 = vmatpush.msra.mxu0 0.0
    %773 = vmatpush.msra.mxu0 %v466
    %774 = vmatmul.f32.gmra.mxu0 %v393
    %v775 = vpop.f32.mrf.mxu0
    %v776 = vadd.f32 0.0, %v775
    %777 = vdwg.mxu0
    %778 = vmatpush.msra.mxu0 0.0
    %779 = vmatpush.msra.mxu0 0.0
    %780 = vmatpush.msra.mxu0 0.0
    %781 = vmatpush.msra.mxu0 0.0
    %782 = vmatpush.msra.mxu0 0.0
    %783 = vmatpush.msra.mxu0 0.0
    %784 = vmatpush.msra.mxu0 0.0
    %785 = vmatpush.msra.mxu0 0.0
    %786 = vmatpush.msra.mxu0 0.0
    %787 = vmatpush.msra.mxu0 0.0
    %788 = vmatpush.msra.mxu0 0.0
    %789 = vmatpush.msra.mxu0 0.0
    %790 = vmatpush.msra.mxu0 0.0
    %791 = vmatpush.msra.mxu0 0.0
    %792 = vmatpush.msra.mxu0 0.0
    %793 = vmatpush.msra.mxu0 %v467
    %794 = vmatmul.f32.gmra.mxu0 %v393
    %v795 = vpop.f32.mrf.mxu0
    %v796 = vadd.f32 0.0, %v795
    %797 = vdwg.mxu0
    %v798 = vadd.f32 %v696, %v756
    %v799 = vadd.f32 %v716, %v776
    %v800 = vadd.f32 %v736, %v796
    %v801 = vmax.f32 %v798, 0.0
    %v802 = vmax.f32 %v799, 0.0
    %v803 = vmax.f32 %v800, 0.0
    %s804 = scalar_lea.vmem [#allocation8], 24
    %805 = vst [vmem:[%s804] sm:$0xff] %v801
    %806 = vst [vmem:[%s804 + $0x8] sm:$0xff] %v802
    %807 = vst [vmem:[%s804 + $0x10] sm:$0xff] %v803
    // Predicated region
    $region42: #{tpu_custom_call.1} parent=1 // pred_check
      _
    $region43: #{tpu_custom_call.1} parent=1 // pred_check_branch
      %809 = sbr.rel (0) target = $region45
    $region44: #{tpu_custom_call.1} parent=1 // pred_region
      %811 = vsyncadd [#allocation4], 0
      %s812 = sshll.u32 [#allocation8], 4
      %s813 = int_to_ptr.vmem [resolvable:$true] %s812
      %s814 = sshll.u32 %s7, 4
      %s815 = int_to_ptr.hbm [resolvable:$true] %s814
      %820 = dma.vmem_to_hbm [thread:$0]  %s813, 768, %s815, [#allocation4], 384, 384, 24
    $region45: #{tpu_custom_call.1} parent=1 // pred_fallthru
      _
    // Predicated region
    $region46: #{tpu_custom_call.1} parent=1 // pred_check
      _
    $region47: #{tpu_custom_call.1} parent=1 // pred_check_branch
      %822 = sbr.rel (0) target = $region49
    $region48: #{tpu_custom_call.1} parent=1 // pred_region
      %824 = dma.done [#allocation4], 768
    $region49: #{tpu_custom_call.1} parent=1 // pred_fallthru
      _
    %825 = vsyncpa [#allocation3], 1
    %826 = vsyncpa [#allocation6], 1
    %827 = vsyncpa [#allocation4], 1

</llo_original>
